<compile_context>
chip_gen: v6e
topology: v6e:2x2x1
jax: 0.10.0
libtpu: 0.0.40
codegen_flags: <defaults>
</compile_context>

<pallas_src>
import math

import jax
import jax.numpy as jnp
from jax.experimental import pallas as pl
from jax.experimental.pallas import tpu as pltpu


def _gcn_kernel(a_ref, x_ref, w_ref, o_ref):
    # a_ref : (N, N)       adjacency (shared, or per-batch with batch squeezed)
    # x_ref : (N, T*F)     all timesteps of this batch element, lane-dense
    # w_ref : (T*F, T*O)   block-diagonal Theta1 (per-timestep feature mixing)
    # o_ref : (N, T*O)     lane-dense output slab
    z = jnp.dot(x_ref[...], w_ref[...],
                preferred_element_type=jnp.float32)        # == X_t @ Theta1, all t at once
    y = jnp.dot(a_ref[...], z,
                preferred_element_type=jnp.float32)        # A @ (X @ Theta)  (node contraction)
    o_ref[...] = jnp.maximum(y, 0.0).astype(o_ref.dtype)   # relu AFTER the A contraction


@jax.jit
def gcn_forward(X, A_hat, Theta1):
    """X: (B, N, T, F) f32; A_hat: (N, N) or (B, N, N); Theta1: (F, O)."""
    B, N, T, F = X.shape
    O = Theta1.shape[1]
    TF, TO = T * F, T * O

    # Contiguous trailing flatten: free (no data movement).
    X2 = X.reshape(B, N, TF)

    # Block-diagonal weight: W[t*F + f, t*O + o] = Theta1[f, o], zeros elsewhere.
    # Applying it to the (T*F)-wide rows is exactly a per-timestep X_t @ Theta1.
    # (In a real model this is a parameter and would be precomputed once.)
    W = jnp.kron(jnp.eye(T, dtype=Theta1.dtype), Theta1)    # (T*F, T*O)

    if A_hat.ndim == 2:
        # Constant index_map -> A stays resident in VMEM; no (B,N,N) broadcast.
        a_spec = pl.BlockSpec((N, N), lambda b: (0, 0))
    else:
        # Per-batch adjacency; batch dim squeezed out of the kernel view.
        a_spec = pl.BlockSpec((None, N, N), lambda b: (b, 0, 0))

    itemsize = jnp.dtype(X.dtype).itemsize
    cost = pl.CostEstimate(
        flops=2 * B * (N * TF * TO + N * N * TO),
        transcendentals=0,
        bytes_accessed=(X2.size + A_hat.size + W.size + B * N * TO) * itemsize,
    )

    out = pl.pallas_call(
        _gcn_kernel,
        out_shape=jax.ShapeDtypeStruct((B, N, TO), X.dtype),
        grid=(B,),
        in_specs=[
            a_spec,
            pl.BlockSpec((None, N, TF), lambda b: (b, 0, 0)),
            pl.BlockSpec((TF, TO), lambda b: (0, 0)),        # W resident in VMEM
        ],
        out_specs=pl.BlockSpec((None, N, TO), lambda b: (b, 0, 0)),
        compiler_params=pltpu.CompilerParams(
            dimension_semantics=("parallel",)),
        cost_estimate=cost,
    )(A_hat, X2, W)

    # Contiguous trailing split back to the PyTorch layout: free.
    return out.reshape(B, N, T, O)


def gcn_reference(X, A_hat, Theta1):
    """Plain-JAX reference mirroring the PyTorch loop."""
    B = X.shape[0]
    if A_hat.ndim == 2:
        A_exp = jnp.broadcast_to(A_hat[None], (B,) + A_hat.shape)
    else:
        A_exp = A_hat
    out = jnp.einsum('bnm,bmtf->bntf', A_exp, X)
    return jax.nn.relu(jnp.einsum('bntf,fo->bnto', out, Theta1))


if __name__ == "__main__":
    # Small shapes consistent with the module (GCN(out_channels=32, spatial_channels=32)).
    B, N, T, d_model, out_model = 2, 16, 8, 32, 32

    key = jax.random.PRNGKey(0)
    kx, ka, kt = jax.random.split(key, 3)

    X = jax.random.normal(kx, (B, N, T, d_model), dtype=jnp.float32)

    # Simple normalized adjacency (row-stochastic, deterministic).
    A_raw = jax.random.uniform(ka, (N, N), dtype=jnp.float32)
    A_hat = A_raw / jnp.sum(A_raw, axis=-1, keepdims=True)

    # Theta1 init: uniform(-stdv, stdv), stdv = 1/sqrt(out_model) (reset_parameters).
    stdv = 1.0 / math.sqrt(out_model)
    Theta1 = jax.random.uniform(
        kt, (d_model, out_model), dtype=jnp.float32, minval=-stdv, maxval=stdv)

    y = gcn_forward(X, A_hat, Theta1)
    jax.block_until_ready(y)

    y_ref = gcn_reference(X, A_hat, Theta1)
    assert y.shape == (B, N, T, out_model)
    assert jnp.allclose(y, y_ref, atol=1e-4, rtol=1e-4), "mismatch vs reference"

    # Also exercise the per-batch (3-D) adjacency path.
    A_batched = jnp.stack([A_hat, A_hat.T / jnp.sum(A_hat.T, -1, keepdims=True)])
    y2 = gcn_forward(X, A_batched, Theta1)
    jax.block_until_ready(y2)
    y2_ref = gcn_reference(X, A_batched, Theta1)
    assert jnp.allclose(y2, y2_ref, atol=1e-4, rtol=1e-4), "mismatch (batched A)"

    print("KERNEL_OK")
</pallas_src>

<mosaic_0001>
module attributes {stable_mosaic.version = 11 : i64} {
  func.func @_gcn_kernel(%arg0: i32, %arg1: memref<16x16xf32, #tpu.memory_space<vmem>>, %arg2: memref<1x16x256xf32, #tpu.memory_space<vmem>>, %arg3: memref<256x256xf32, #tpu.memory_space<vmem>>, %arg4: memref<1x16x256xf32, #tpu.memory_space<vmem>>) attributes {dimension_semantics = [#tpu.dimension_semantics<parallel>], iteration_bounds = array<i64: 2>, scalar_prefetch = 0 : i64, scratch_operands = 0 : i64, tpu.core_type = #tpu.core_type<tc>, window_params = [{pipeline_mode = #tpu.pipeline_mode<synchronous>, transform_indices = @transform_0, window_bounds = array<i64: 16, 16>}, {transform_indices = @transform_1, window_bounds = array<i64: 1, 16, 256>}, {pipeline_mode = #tpu.pipeline_mode<synchronous>, transform_indices = @transform_2, window_bounds = array<i64: 256, 256>}, {transform_indices = @transform_3, window_bounds = array<i64: 1, 16, 256>}]} {
    %c0 = arith.constant 0 : index
    %c0_0 = arith.constant 0 : index
    %c0_1 = arith.constant 0 : index
    %0 = vector.load %arg2[%c0, %c0_0, %c0_1] : memref<1x16x256xf32, #tpu.memory_space<vmem>>, vector<1x16x256xf32>
    %1 = vector.shape_cast %0 : vector<1x16x256xf32> to vector<16x256xf32>
    %c0_2 = arith.constant 0 : index
    %c0_3 = arith.constant 0 : index
    %2 = vector.load %arg3[%c0_2, %c0_3] : memref<256x256xf32, #tpu.memory_space<vmem>>, vector<256x256xf32>
    %cst = arith.constant dense<0.000000e+00> : vector<16x256xf32>
    %3 = tpu.matmul %1, %2, %cst {dimension_numbers = #tpu.dot_dimension_numbers<[1], [0], [0], [1], [0, 0, 1, 1], [], []>} : vector<16x256xf32>, vector<256x256xf32>, vector<16x256xf32> -> vector<16x256xf32>
    %c0_4 = arith.constant 0 : index
    %c0_5 = arith.constant 0 : index
    %4 = vector.load %arg1[%c0_4, %c0_5] : memref<16x16xf32, #tpu.memory_space<vmem>>, vector<16x16xf32>
    %cst_6 = arith.constant dense<0.000000e+00> : vector<16x256xf32>
    %5 = tpu.matmul %4, %3, %cst_6 {dimension_numbers = #tpu.dot_dimension_numbers<[1], [0], [0], [1], [0, 0, 1, 1], [], []>} : vector<16x16xf32>, vector<16x256xf32>, vector<16x256xf32> -> vector<16x256xf32>
    %cst_7 = arith.constant 0.000000e+00 : f32
    %6 = vector.broadcast %cst_7 : f32 to vector<16x256xf32>
    %7 = arith.maximumf %5, %6 : vector<16x256xf32>
    %c0_8 = arith.constant 0 : index
    %c0_9 = arith.constant 0 : index
    %c0_10 = arith.constant 0 : index
    %8 = vector.load %arg4[%c0_8, %c0_9, %c0_10] : memref<1x16x256xf32, #tpu.memory_space<vmem>>, vector<1x16x256xf32>
    %9 = vector.shape_cast %8 : vector<1x16x256xf32> to vector<16x256xf32>
    %10 = vector.shape_cast %7 : vector<16x256xf32> to vector<1x16x256xf32>
    tpu.vector_store %arg4[%c0_8, %c0_9, %c0_10], %10 {strides = array<i32>} : memref<1x16x256xf32, #tpu.memory_space<vmem>>, vector<1x16x256xf32>,
    return
  }
  func.func @transform_0(%arg0: i32) -> (i32, i32) {
    %c0_i32 = arith.constant 0 : i32
    %c0_i32_0 = arith.constant 0 : i32
    %c0_i32_1 = arith.constant 0 : i32
    return %c0_i32, %c0_i32_0 : i32, i32
  }
  func.func @transform_1(%arg0: i32) -> (i32, i32, i32) {
    %c0_i32 = arith.constant 0 : i32
    %c0_i32_0 = arith.constant 0 : i32
    %c0_i32_1 = arith.constant 0 : i32
    return %arg0, %c0_i32, %c0_i32_0 : i32, i32, i32
  }
  func.func @transform_2(%arg0: i32) -> (i32, i32) {
    %c0_i32 = arith.constant 0 : i32
    %c0_i32_0 = arith.constant 0 : i32
    %c0_i32_1 = arith.constant 0 : i32
    return %c0_i32, %c0_i32_0 : i32, i32
  }
  func.func @transform_3(%arg0: i32) -> (i32, i32, i32) {
    %c0_i32 = arith.constant 0 : i32
    %c0_i32_0 = arith.constant 0 : i32
    %c0_i32_1 = arith.constant 0 : i32
    return %arg0, %c0_i32, %c0_i32_0 : i32, i32, i32
  }
}

</mosaic_0001>

<llo_original>
// kernel: gcn_forward.1
$region0: #{gcn_forward.1}
  #allocation0 [shape = 'u32[]', space=smem, size = 0x4, offset = 0x4, fixed_abs, tag = 'smem constant byte address 0x4 - core index']
  #allocation1 [shape = 'u32[144,128]{1,0:T(1,128)}', space=vmem, size = 0x12000, scoped, tag = 'internal scratch']
  %s0 = inlined_call_operand.vmem [shape: f32[16,16], index: 0, kind: input, shape index: {}]
  %s1 = inlined_call_operand.vmem [shape: f32[2,16,256], index: 1, kind: input, shape index: {}]
  %s2 = inlined_call_operand.vmem [shape: f32[256,256], index: 2, kind: input, shape index: {}]
  %s3 = inlined_call_operand.vmem [shape: f32[2,16,256], index: 3, kind: output, shape index: {}]
  %s4 = sld [smem:[#allocation0]]
  $region45: #{gcn_forward.1} parent=0
    _
  %s6 = ssub.s32 1, %s4
  %s7 = scalar_select 0, %s6, %s4
  loop: start=0, step=1, limit=4
  $region2: #{gcn_forward.1} parent=0 // loop_pre_header
    _
  $region3: #{gcn_forward.1} parent=0 // loop_header
    %s9 = sphi 0, %s13
    %p10 = scmp.ge.s32.totalorder %s9, 4
    %s17 = sphi 0, %s17
    %s19 = sphi 0, %s17
    %s20 = sphi 0, %s19
    %s34 = sphi 0, %s20
    %s40 = sphi 0, %s42
    %s43 = sphi 0, %s40
    %s44 = sphi 0, %s43
    %s60 = sphi 0, %s44
    %s64 = sphi 0, %s64
    %s66 = sphi 0, %s64
    %s67 = sphi 0, %s66
    %s81 = sphi 0, %s67
    %s87 = sphi 0, %s89
    %s90 = sphi 0, %s87
    %s91 = sphi 0, %s90
    %s107 = sphi 0, %s91
  $region4: #{gcn_forward.1} parent=0 // loop_header_branch
    %12 = sbr.rel (%p10) target = $region8
  $region5: #{gcn_forward.1} parent=0 // loop_body
    %s14 = ssub.s32 %s9, 1
    %s15 = ssub.s32 %s9, 2
    %s16 = sadd.s32 %s9, 1
    %s18 = sadd.s32 %s17, 1
    %p21 = scmp.eq.s32.totalorder %s9, 1
    %p22 = scmp.ne.s32.totalorder %s17, %s19
    %p23 = scmp.eq.s32.totalorder %s9, 0
    %p24 = por %p22, %p23
    %p25 = scmp.ne.s32.totalorder %s17, %s19
    %p26 = scmp.eq.s32.totalorder %s14, 1
    %p27 = por %p25, %p26
    %p28 = scmp.ne.s32.totalorder %s19, %s20
    %p29 = scmp.eq.s32.totalorder %s14, 0
    %p30 = por %p28, %p29
    %p31 = scmp.ne.s32.totalorder %s19, %s20
    %p32 = scmp.eq.s32.totalorder %s15, 1
    %p33 = por %p31, %p32
    %p35 = scmp.ne.s32.totalorder %s20, %s34
    %p36 = scmp.eq.s32.totalorder %s15, 0
    %p37 = por %p35, %p36
    %s38 = ssub.s32 %s9, %s16
    %p39 = scmp.eq.s32.totalorder %s38, 0
    %s41 = sadd.s32 %s40, 1
    %s42 = scalar_select %p39, %s40, %s41
    %p45 = pneg %p39
    %p46 = scmp.eq.s32.totalorder %s9, 1
    %p47 = por %p45, %p46
    %p48 = scmp.ne.s32.totalorder %s40, %s43
    %p49 = scmp.eq.s32.totalorder %s9, 0
    %p50 = por %p48, %p49
    %p51 = scmp.ne.s32.totalorder %s40, %s43
    %p52 = scmp.eq.s32.totalorder %s14, 1
    %p53 = por %p51, %p52
    %p54 = scmp.ne.s32.totalorder %s43, %s44
    %p55 = scmp.eq.s32.totalorder %s14, 0
    %p56 = por %p54, %p55
    %p57 = scmp.ne.s32.totalorder %s43, %s44
    %p58 = scmp.eq.s32.totalorder %s15, 1
    %p59 = por %p57, %p58
    %p61 = scmp.ne.s32.totalorder %s44, %s60
    %p62 = scmp.eq.s32.totalorder %s15, 0
    %p63 = por %p61, %p62
    %s65 = sadd.s32 %s64, 1
    %p68 = scmp.eq.s32.totalorder %s9, 1
    %p69 = scmp.ne.s32.totalorder %s64, %s66
    %p70 = scmp.eq.s32.totalorder %s9, 0
    %p71 = por %p69, %p70
    %p72 = scmp.ne.s32.totalorder %s64, %s66
    %p73 = scmp.eq.s32.totalorder %s14, 1
    %p74 = por %p72, %p73
    %p75 = scmp.ne.s32.totalorder %s66, %s67
    %p76 = scmp.eq.s32.totalorder %s14, 0
    %p77 = por %p75, %p76
    %p78 = scmp.ne.s32.totalorder %s66, %s67
    %p79 = scmp.eq.s32.totalorder %s15, 1
    %p80 = por %p78, %p79
    %p82 = scmp.ne.s32.totalorder %s67, %s81
    %p83 = scmp.eq.s32.totalorder %s15, 0
    %p84 = por %p82, %p83
    %s85 = ssub.s32 %s9, %s16
    %p86 = scmp.eq.s32.totalorder %s85, 0
    %s88 = sadd.s32 %s87, 1
    %s89 = scalar_select %p86, %s87, %s88
    %p92 = pneg %p86
    %p93 = scmp.eq.s32.totalorder %s9, 1
    %p94 = por %p92, %p93
    %p95 = scmp.ne.s32.totalorder %s87, %s90
    %p96 = scmp.eq.s32.totalorder %s9, 0
    %p97 = por %p95, %p96
    %p98 = scmp.ne.s32.totalorder %s87, %s90
    %p99 = scmp.eq.s32.totalorder %s14, 1
    %p100 = por %p98, %p99
    %p101 = scmp.ne.s32.totalorder %s90, %s91
    %p102 = scmp.eq.s32.totalorder %s14, 0
    %p103 = por %p101, %p102
    %p104 = scmp.ne.s32.totalorder %s90, %s91
    %p105 = scmp.eq.s32.totalorder %s15, 1
    %p106 = por %p104, %p105
    %p108 = scmp.ne.s32.totalorder %s91, %s107
    %p109 = scmp.eq.s32.totalorder %s15, 0
    %p110 = por %p108, %p109
    %p111 = scmp.le.s32.totalorder 1, %s9
    %p112 = scmp.lt.s32.totalorder %s9, 3
    %p113 = pnand %p111, %p112
    %p114 = pneg %p113
    // Predicated region
    $region9: #{gcn_forward.1} parent=5 // pred_check
      _
    $region10: #{gcn_forward.1} parent=5 // pred_check_branch
      %116 = sbr.rel (%p113) target = $region12
    $region11: #{gcn_forward.1} parent=5 // pred_region
      %s117 = ssub.s32 %s9, 1
      // Predicated region
      $region13: #{gcn_forward.1} parent=11 // pred_check
        %p118 = pneg %p30
      $region14: #{gcn_forward.1} parent=11 // pred_check_branch
        %120 = sbr.rel (%p118) target = $region16
      $region15: #{gcn_forward.1} parent=11 // pred_region
        _
      $region16: #{gcn_forward.1} parent=11 // pred_fallthru
        _
      // Predicated region
      $region17: #{gcn_forward.1} parent=11 // pred_check
        %p121 = pneg %p77
      $region18: #{gcn_forward.1} parent=11 // pred_check_branch
        %123 = sbr.rel (%p121) target = $region20
      $region19: #{gcn_forward.1} parent=11 // pred_region
        _
      $region20: #{gcn_forward.1} parent=11 // pred_fallthru
        _
    $region12: #{gcn_forward.1} parent=5 // pred_fallthru
      _
    %p124 = scmp.lt.s32.totalorder %s9, 2
    // Predicated region
    $region21: #{gcn_forward.1} parent=5 // pred_check
      %p125 = pneg %p124
    $region22: #{gcn_forward.1} parent=5 // pred_check_branch
      %127 = sbr.rel (%p125) target = $region24
    $region23: #{gcn_forward.1} parent=5 // pred_region
      // Predicated region
      $region25: #{gcn_forward.1} parent=23 // pred_check
        %p128 = pneg %p50
      $region26: #{gcn_forward.1} parent=23 // pred_check_branch
        %130 = sbr.rel (%p128) target = $region28
      $region27: #{gcn_forward.1} parent=23 // pred_region
        %p131 = scmp.lt.s32.totalorder %s9, 1
        %s132 = scalar_select %p131, %s9, 1
        %s133 = smul.addr %s132, 4
        %s134 = smul.addr %s133, 8
        %s135 = scalar_lea.vmem %s1, %s134
      $region28: #{gcn_forward.1} parent=23 // pred_fallthru
        _
    $region24: #{gcn_forward.1} parent=5 // pred_fallthru
      _
    %p136 = scmp.le.s32.totalorder 1, %s9
    %p137 = scmp.lt.s32.totalorder %s9, 3
    %p138 = pnand %p136, %p137
    %p139 = pneg %p138
    // Predicated region
    $region29: #{gcn_forward.1} parent=5 // pred_check
      _
    $region30: #{gcn_forward.1} parent=5 // pred_check_branch
      %141 = sbr.rel (%p138) target = $region32
    $region31: #{gcn_forward.1} parent=5 // pred_region
      %s142 = ssub.s32 %s9, 1
      %p143 = pneg %p30
      %p144 = pneg %p27
      %p145 = scmp.lt.s32.totalorder %s14, 1
      %s146 = scalar_select %p145, %s14, 1
      %s147 = smul.addr %s146, 4
      %s148 = smul.addr %s147, 8
      %s149 = scalar_lea.vmem %s1, %s148
      %p150 = pneg %p56
      %p151 = pneg %p53
      %p152 = pneg %p77
      %p153 = pneg %p74
      %p154 = pneg %p103
      %p155 = pneg %p100
      %p156 = scmp.lt.s32.totalorder %s14, 1
      %s157 = scalar_select %p156, %s14, 1
      %s158 = smul.addr %s157, 4
      %s159 = smul.addr %s158, 8
      %s160 = scalar_lea.vmem %s3, %s159
      %p161 = scmp.lt.s32.totalorder %s14, 1
      %s162 = scalar_select %p161, %s14, 1
      %s163 = smul.addr %s162, 4
      %s164 = smul.addr %s163, 8
      %s165 = scalar_lea.vmem %s1, %s164
      %p166 = scmp.lt.s32.totalorder %s14, 1
      %s167 = scalar_select %p166, %s14, 1
      %s168 = smul.addr %s167, 4
      %s169 = smul.addr %s168, 8
      %s170 = scalar_lea.vmem %s3, %s169
      %v171 = vld [vmem:[%s165] sm:$0xff]
      %v172 = vld [vmem:[%s165 + $0x8] sm:$0xff]
      %v173 = vld [vmem:[%s165 + $0x10] sm:$0xff]
      %v174 = vld [vmem:[%s165 + $0x18] sm:$0xff]
      %v175 = vld [vmem:[%s2] sm:$0xff]
      %v176 = vld [vmem:[%s2 + $0x8] sm:$0xff]
      %v177 = vld [vmem:[%s2 + $0x10] sm:$0xff]
      %v178 = vld [vmem:[%s2 + $0x18] sm:$0xff]
      %v179 = vld [vmem:[%s2 + $0x20] sm:$0xff]
      %v180 = vld [vmem:[%s2 + $0x28] sm:$0xff]
      %v181 = vld [vmem:[%s2 + $0x30] sm:$0xff]
      %v182 = vld [vmem:[%s2 + $0x38] sm:$0xff]
      %v183 = vld [vmem:[%s2 + $0x40] sm:$0xff]
      %v184 = vld [vmem:[%s2 + $0x48] sm:$0xff]
      %v185 = vld [vmem:[%s2 + $0x50] sm:$0xff]
      %v186 = vld [vmem:[%s2 + $0x58] sm:$0xff]
      %v187 = vld [vmem:[%s2 + $0x60] sm:$0xff]
      %v188 = vld [vmem:[%s2 + $0x68] sm:$0xff]
      %v189 = vld [vmem:[%s2 + $0x70] sm:$0xff]
      %v190 = vld [vmem:[%s2 + $0x78] sm:$0xff]
      %v191 = vld [vmem:[%s2 + $0x80] sm:$0xff]
      %v192 = vld [vmem:[%s2 + $0x88] sm:$0xff]
      %v193 = vld [vmem:[%s2 + $0x90] sm:$0xff]
      %v194 = vld [vmem:[%s2 + $0x98] sm:$0xff]
      %v195 = vld [vmem:[%s2 + $0xa0] sm:$0xff]
      %v196 = vld [vmem:[%s2 + $0xa8] sm:$0xff]
      %v197 = vld [vmem:[%s2 + $0xb0] sm:$0xff]
      %v198 = vld [vmem:[%s2 + $0xb8] sm:$0xff]
      %v199 = vld [vmem:[%s2 + $0xc0] sm:$0xff]
      %v200 = vld [vmem:[%s2 + $0xc8] sm:$0xff]
      %v201 = vld [vmem:[%s2 + $0xd0] sm:$0xff]
      %v202 = vld [vmem:[%s2 + $0xd8] sm:$0xff]
      %v203 = vld [vmem:[%s2 + $0xe0] sm:$0xff]
      %v204 = vld [vmem:[%s2 + $0xe8] sm:$0xff]
      %v205 = vld [vmem:[%s2 + $0xf0] sm:$0xff]
      %v206 = vld [vmem:[%s2 + $0xf8] sm:$0xff]
      %v207 = vld [vmem:[%s2 + $0x100] sm:$0xff]
      %v208 = vld [vmem:[%s2 + $0x108] sm:$0xff]
      %v209 = vld [vmem:[%s2 + $0x110] sm:$0xff]
      %v210 = vld [vmem:[%s2 + $0x118] sm:$0xff]
      %v211 = vld [vmem:[%s2 + $0x120] sm:$0xff]
      %v212 = vld [vmem:[%s2 + $0x128] sm:$0xff]
      %v213 = vld [vmem:[%s2 + $0x130] sm:$0xff]
      %v214 = vld [vmem:[%s2 + $0x138] sm:$0xff]
      %v215 = vld [vmem:[%s2 + $0x140] sm:$0xff]
      %v216 = vld [vmem:[%s2 + $0x148] sm:$0xff]
      %v217 = vld [vmem:[%s2 + $0x150] sm:$0xff]
      %v218 = vld [vmem:[%s2 + $0x158] sm:$0xff]
      %v219 = vld [vmem:[%s2 + $0x160] sm:$0xff]
      %v220 = vld [vmem:[%s2 + $0x168] sm:$0xff]
      %v221 = vld [vmem:[%s2 + $0x170] sm:$0xff]
      %v222 = vld [vmem:[%s2 + $0x178] sm:$0xff]
      %v223 = vld [vmem:[%s2 + $0x180] sm:$0xff]
      %v224 = vld [vmem:[%s2 + $0x188] sm:$0xff]
      %v225 = vld [vmem:[%s2 + $0x190] sm:$0xff]
      %v226 = vld [vmem:[%s2 + $0x198] sm:$0xff]
      %v227 = vld [vmem:[%s2 + $0x1a0] sm:$0xff]
      %v228 = vld [vmem:[%s2 + $0x1a8] sm:$0xff]
      %v229 = vld [vmem:[%s2 + $0x1b0] sm:$0xff]
      %v230 = vld [vmem:[%s2 + $0x1b8] sm:$0xff]
      %v231 = vld [vmem:[%s2 + $0x1c0] sm:$0xff]
      %v232 = vld [vmem:[%s2 + $0x1c8] sm:$0xff]
      %v233 = vld [vmem:[%s2 + $0x1d0] sm:$0xff]
      %v234 = vld [vmem:[%s2 + $0x1d8] sm:$0xff]
      %v235 = vld [vmem:[%s2 + $0x1e0] sm:$0xff]
      %v236 = vld [vmem:[%s2 + $0x1e8] sm:$0xff]
      %v237 = vld [vmem:[%s2 + $0x1f0] sm:$0xff]
      %v238 = vld [vmem:[%s2 + $0x1f8] sm:$0xff]
      %239 = vmatprep.subr.mxu0 %v206
      %240 = vmatpush1.msra.mxu0 %v205
      %241 = vmatprep.subr.mxu0 %v204
      %242 = vmatpush1.msra.mxu0 %v203
      %243 = vmatprep.subr.mxu0 %v202
      %244 = vmatpush1.msra.mxu0 %v201
      %245 = vmatprep.subr.mxu0 %v200
      %246 = vmatpush1.msra.mxu0 %v199
      %247 = vmatprep.subr.mxu0 %v198
      %248 = vmatpush1.msra.mxu0 %v197
      %249 = vmatprep.subr.mxu0 %v196
      %250 = vmatpush1.msra.mxu0 %v195
      %251 = vmatprep.subr.mxu0 %v194
      %252 = vmatpush1.msra.mxu0 %v193
      %253 = vmatprep.subr.mxu0 %v192
      %254 = vmatpush1.msra.mxu0 %v191
      %255 = vmatprep.subr.mxu0 %v190
      %256 = vmatpush1.msra.mxu0 %v189
      %257 = vmatprep.subr.mxu0 %v188
      %258 = vmatpush1.msra.mxu0 %v187
      %259 = vmatprep.subr.mxu0 %v186
      %260 = vmatpush1.msra.mxu0 %v185
      %261 = vmatprep.subr.mxu0 %v184
      %262 = vmatpush1.msra.mxu0 %v183
      %263 = vmatprep.subr.mxu0 %v182
      %264 = vmatpush1.msra.mxu0 %v181
      %265 = vmatprep.subr.mxu0 %v180
      %266 = vmatpush1.msra.mxu0 %v179
      %267 = vmatprep.subr.mxu0 %v178
      %268 = vmatpush1.msra.mxu0 %v177
      %269 = vmatprep.subr.mxu0 %v176
      %270 = vmatpush1.msra.mxu0 %v175
      %271 = vmatprep.subr.mxu0 %v238
      %272 = vmatpush2.msra.mxu0 %v237
      %273 = vmatprep.subr.mxu0 %v236
      %274 = vmatpush2.msra.mxu0 %v235
      %275 = vmatprep.subr.mxu0 %v234
      %276 = vmatpush2.msra.mxu0 %v233
      %277 = vmatprep.subr.mxu0 %v232
      %278 = vmatpush2.msra.mxu0 %v231
      %279 = vmatprep.subr.mxu0 %v230
      %280 = vmatpush2.msra.mxu0 %v229
      %281 = vmatprep.subr.mxu0 %v228
      %282 = vmatpush2.msra.mxu0 %v227
      %283 = vmatprep.subr.mxu0 %v226
      %284 = vmatpush2.msra.mxu0 %v225
      %285 = vmatprep.subr.mxu0 %v224
      %286 = vmatpush2.msra.mxu0 %v223
      %287 = vmatprep.subr.mxu0 %v222
      %288 = vmatpush2.msra.mxu0 %v221
      %289 = vmatprep.subr.mxu0 %v220
      %290 = vmatpush2.msra.mxu0 %v219
      %291 = vmatprep.subr.mxu0 %v218
      %292 = vmatpush2.msra.mxu0 %v217
      %293 = vmatprep.subr.mxu0 %v216
      %294 = vmatpush2.msra.mxu0 %v215
      %295 = vmatprep.subr.mxu0 %v214
      %296 = vmatpush2.msra.mxu0 %v213
      %297 = vmatprep.subr.mxu0 %v212
      %298 = vmatpush2.msra.mxu0 %v211
      %299 = vmatprep.subr.mxu0 %v210
      %300 = vmatpush2.msra.mxu0 %v209
      %301 = vmatprep.subr.mxu0 %v208
      %302 = vmatpush2.msra.mxu0 %v207
      %303 = vmatprep.mubr.f32.mxu0 %v172
      %304 = vmatmul.mubr.f32.gmra.mxu0 %v171
      %v305 = vpop.f32.mrf.mxu0
      %v306 = vadd.f32 0.0, %v305
      %v307 = vpop.f32.mrf.mxu0
      %v308 = vadd.f32 0.0, %v307
      %309 = vmatprep.mubr.f32.mxu0 %v174
      %310 = vmatmul.mubr.f32.gmra.mxu0 %v173
      %v311 = vpop.f32.mrf.mxu0
      %v312 = vadd.f32 0.0, %v311
      %v313 = vpop.f32.mrf.mxu0
      %v314 = vadd.f32 0.0, %v313
      %315 = vdwg.mxu0
      %v316 = vld [vmem:[%s0] sm:$0xff]
      %v317 = vld [vmem:[%s0 + $0x8] sm:$0xff]
      %vm318 = vcmask 130048
      %v320 = vsel %vm318, %v316, 0
      %v323 = vsel %vm318, %v317, 0
      %325 = vmatprep.subr.mxu0 0.0
      %326 = vmatpush1.msra.mxu0 0.0
      %327 = vmatprep.subr.mxu0 0.0
      %328 = vmatpush1.msra.mxu0 0.0
      %329 = vmatprep.subr.mxu0 0.0
      %330 = vmatpush1.msra.mxu0 0.0
      %331 = vmatprep.subr.mxu0 0.0
      %332 = vmatpush1.msra.mxu0 0.0
      %333 = vmatprep.subr.mxu0 0.0
      %334 = vmatpush1.msra.mxu0 0.0
      %335 = vmatprep.subr.mxu0 0.0
      %336 = vmatpush1.msra.mxu0 0.0
      %337 = vmatprep.subr.mxu0 0.0
      %338 = vmatpush1.msra.mxu0 0.0
      %339 = vmatprep.subr.mxu0 0.0
      %340 = vmatpush1.msra.mxu0 0.0
      %341 = vmatprep.subr.mxu0 0.0
      %342 = vmatpush1.msra.mxu0 0.0
      %343 = vmatprep.subr.mxu0 0.0
      %344 = vmatpush1.msra.mxu0 0.0
      %345 = vmatprep.subr.mxu0 0.0
      %346 = vmatpush1.msra.mxu0 0.0
      %347 = vmatprep.subr.mxu0 0.0
      %348 = vmatpush1.msra.mxu0 0.0
      %349 = vmatprep.subr.mxu0 0.0
      %350 = vmatpush1.msra.mxu0 0.0
      %351 = vmatprep.subr.mxu0 0.0
      %352 = vmatpush1.msra.mxu0 0.0
      %353 = vmatprep.subr.mxu0 %v314
      %354 = vmatpush1.msra.mxu0 %v312
      %355 = vmatprep.subr.mxu0 %v308
      %356 = vmatpush1.msra.mxu0 %v306
      %357 = vmatprep.subr.mxu0 0.0
      %358 = vmatpush2.msra.mxu0 0.0
      %359 = vmatprep.subr.mxu0 0.0
      %360 = vmatpush2.msra.mxu0 0.0
      %361 = vmatprep.subr.mxu0 0.0
      %362 = vmatpush2.msra.mxu0 0.0
      %363 = vmatprep.subr.mxu0 0.0
      %364 = vmatpush2.msra.mxu0 0.0
      %365 = vmatprep.subr.mxu0 0.0
      %366 = vmatpush2.msra.mxu0 0.0
      %367 = vmatprep.subr.mxu0 0.0
      %368 = vmatpush2.msra.mxu0 0.0
      %369 = vmatprep.subr.mxu0 0.0
      %370 = vmatpush2.msra.mxu0 0.0
      %371 = vmatprep.subr.mxu0 0.0
      %372 = vmatpush2.msra.mxu0 0.0
      %373 = vmatprep.subr.mxu0 0.0
      %374 = vmatpush2.msra.mxu0 0.0
      %375 = vmatprep.subr.mxu0 0.0
      %376 = vmatpush2.msra.mxu0 0.0
      %377 = vmatprep.subr.mxu0 0.0
      %378 = vmatpush2.msra.mxu0 0.0
      %379 = vmatprep.subr.mxu0 0.0
      %380 = vmatpush2.msra.mxu0 0.0
      %381 = vmatprep.subr.mxu0 0.0
      %382 = vmatpush2.msra.mxu0 0.0
      %383 = vmatprep.subr.mxu0 0.0
      %384 = vmatpush2.msra.mxu0 0.0
      %385 = vmatprep.subr.mxu0 0.0
      %386 = vmatpush2.msra.mxu0 0.0
      %387 = vmatprep.subr.mxu0 0.0
      %388 = vmatpush2.msra.mxu0 0.0
      %389 = vmatprep.mubr.f32.mxu0 0.0
      %390 = vmatmul.mubr.f32.gmra.mxu0 %v320
      %v391 = vpop.f32.mrf.mxu0
      %v392 = vadd.f32 0.0, %v391
      %v393 = vpop.f32.mrf.mxu0
      %v394 = vadd.f32 0.0, %v393
      %395 = vmatprep.mubr.f32.mxu0 0.0
      %396 = vmatmul.mubr.f32.gmra.mxu0 %v323
      %v397 = vpop.f32.mrf.mxu0
      %v398 = vadd.f32 0.0, %v397
      %v399 = vpop.f32.mrf.mxu0
      %v400 = vadd.f32 0.0, %v399
      %401 = vdwg.mxu0
      %v402 = vmax.f32 %v392, 0.0
      %v403 = vmax.f32 %v394, 0.0
      %v404 = vmax.f32 %v398, 0.0
      %v405 = vmax.f32 %v400, 0.0
      %406 = vst [vmem:[%s170] sm:$0xff] %v402
      %407 = vst [vmem:[%s170 + $0x8] sm:$0xff] %v403
      %408 = vst [vmem:[%s170 + $0x10] sm:$0xff] %v404
      %409 = vst [vmem:[%s170 + $0x18] sm:$0xff] %v405
      %p410 = scmp.lt.s32.totalorder %s14, 1
      %s411 = scalar_select %p410, %s14, 1
      %s412 = smul.addr %s411, 4
      %s413 = smul.addr %s412, 8
      %s414 = scalar_lea.vmem %s3, %s413
      // Predicated region
      $region33: #{gcn_forward.1} parent=31 // pred_check
        %p415 = pneg %p100
      $region34: #{gcn_forward.1} parent=31 // pred_check_branch
        %417 = sbr.rel (%p415) target = $region36
      $region35: #{gcn_forward.1} parent=31 // pred_region
        _
      $region36: #{gcn_forward.1} parent=31 // pred_fallthru
        _
    $region32: #{gcn_forward.1} parent=5 // pred_fallthru
      _
    %p418 = scmp.le.s32.totalorder 2, %s9
    // Predicated region
    $region37: #{gcn_forward.1} parent=5 // pred_check
      %p419 = pneg %p418
    $region38: #{gcn_forward.1} parent=5 // pred_check_branch
      %421 = sbr.rel (%p419) target = $region40
    $region39: #{gcn_forward.1} parent=5 // pred_region
      %s422 = ssub.s32 %s9, 2
      // Predicated region
      $region41: #{gcn_forward.1} parent=39 // pred_check
        %p423 = pneg %p106
      $region42: #{gcn_forward.1} parent=39 // pred_check_branch
        %425 = sbr.rel (%p423) target = $region44
      $region43: #{gcn_forward.1} parent=39 // pred_region
        %p426 = scmp.lt.s32.totalorder %s15, 1
        %s427 = scalar_select %p426, %s15, 1
        %s428 = smul.addr %s427, 4
        %s429 = smul.addr %s428, 8
        %s430 = scalar_lea.vmem %s3, %s429
      $region44: #{gcn_forward.1} parent=39 // pred_fallthru
        _
    $region40: #{gcn_forward.1} parent=5 // pred_fallthru
      _
  $region6: #{gcn_forward.1} parent=0 // loop_footer
    %s13 = sadd.s32 1, %s9
  $region7: #{gcn_forward.1} parent=0 // loop_footer_branch
    %8 = sbr.rel target = $region3
  $region8: #{gcn_forward.1} parent=0 // loop_exit
    _

</llo_original>
